<compile_context>
chip_gen: v5e
topology: v5e:2x2
jax: 0.10.0
libtpu: 0.0.40
codegen_flags: <defaults>
</compile_context>

<pallas_src>
import jax
import jax.numpy as jnp
from jax.experimental import pallas as pl
from jax.experimental.pallas import tpu as pltpu


def gcn_kernel(x_ref, halo_ref, w1_ref, b1_ref, w2_ref, b2_ref, o_ref):
    # discovery: per-node Linear(Fin -> H).  bf16 MXU inputs, f32 accumulate.
    h = jnp.dot(x_ref[...], w1_ref[...],
                preferred_element_type=jnp.float32) + b1_ref[...]   # (TM, H) f32

    tm = h.shape[0]
    # Precomputed discovery outputs of the two halo nodes of this row tile
    # (row 0: node tile_start-1, row 1: node tile_end; remaining rows are pad).
    h_prev = halo_ref[0:1, :]            # (1, H) f32
    h_next = halo_ref[1:2, :]            # (1, H) f32

    # aggregation (g.push with sum) for the ring graph: m[i] = h[i-1] + h[i+1].
    # Sublane rolls ride the XLU slot.  pltpu.roll requires shift >= 0, so the
    # "-1" roll is expressed as shift = TM-1.
    up = pltpu.roll(h, shift=1, axis=0)          # up[i]   = h[i-1]  (wrong at row 0)
    down = pltpu.roll(h, shift=tm - 1, axis=0)   # down[i] = h[i+1]  (wrong at row TM-1)

    # Cheap boundary patch: (TM,1) column mask broadcast into the select.
    row = jax.lax.broadcasted_iota(jnp.int32, (tm, 1), 0)
    up = jnp.where(row == 0, h_prev, up)
    down = jnp.where(row == tm - 1, h_next, down)
    m = up + down                                                    # (TM, H) f32

    # inclusion: per-node Linear(H -> Fout).  Cast to bf16 for the MXU,
    # accumulate f32, add bias in f32.
    y = jnp.dot(m.astype(w2_ref.dtype), w2_ref[...],
                preferred_element_type=jnp.float32) + b2_ref[...]
    o_ref[...] = y.astype(o_ref.dtype)


def gcn_forward(x, halo_h, w1, b1, w2, b2, *, tile_m, halo_rows):
    n, f_in = x.shape
    h_dim = w1.shape[1]
    f_out = w2.shape[1]
    assert n % tile_m == 0
    grid_m = n // tile_m
    return pl.pallas_call(
        gcn_kernel,
        # Output kept f32; switch to bf16 here if the consumer tolerates it
        # (halves output HBM writeback).
        out_shape=jax.ShapeDtypeStruct((n, f_out), jnp.float32),
        grid=(grid_m,),
        in_specs=[
            pl.BlockSpec((tile_m, f_in), lambda i: (i, 0)),      # node-row tile of x (bf16)
            pl.BlockSpec((halo_rows, h_dim), lambda i: (i, 0)),  # precomputed halo h rows (f32)
            pl.BlockSpec((f_in, h_dim), lambda i: (0, 0)),       # W1 (resident)
            pl.BlockSpec((1, h_dim), lambda i: (0, 0)),          # b1
            pl.BlockSpec((h_dim, f_out), lambda i: (0, 0)),      # W2 (resident)
            pl.BlockSpec((1, f_out), lambda i: (0, 0)),          # b2
        ],
        out_specs=pl.BlockSpec((tile_m, f_out), lambda i: (i, 0)),
        compiler_params=pltpu.CompilerParams(
            dimension_semantics=("parallel",)),
    )(x, halo_h, w1, b1, w2, b2)


def gcn_reference(x_bf, adj, w1_bf, b1, w2_bf, b2):
    # Same math through the dense adjacency, with identical bf16 MXU operands.
    h = jnp.dot(x_bf, w1_bf, preferred_element_type=jnp.float32) + b1
    m = jnp.dot(adj, h, precision=jax.lax.Precision.HIGHEST)
    return jnp.dot(m.astype(jnp.bfloat16), w2_bf,
                   preferred_element_type=jnp.float32) + b2


if __name__ == "__main__":
    # Lane-dense sizes: feature dims are multiples of 128.
    # TILE_M=256 -> grid=(2,): 2 parallel steps (both v7x TCs busy), and only
    # 2 sequential steps of fixed overhead on v5e/v6e.
    N, F_IN, HID, F_OUT = 512, 128, 128, 128
    TILE_M = 256
    HALO_ROWS = 8   # 2 real halo h-rows + pad to an f32 (8,128) sublane tile

    key = jax.random.PRNGKey(0)
    kx, kw1, kb1, kw2, kb2 = jax.random.split(key, 5)

    # node features and the two Linear layers (weights stored as [in, out])
    x = jax.random.normal(kx, (N, F_IN), dtype=jnp.float32)
    w1 = jax.random.normal(kw1, (F_IN, HID), dtype=jnp.float32) * 0.1
    b1 = jax.random.normal(kb1, (1, HID), dtype=jnp.float32) * 0.1
    w2 = jax.random.normal(kw2, (HID, F_OUT), dtype=jnp.float32) * 0.1
    b2 = jax.random.normal(kb2, (1, F_OUT), dtype=jnp.float32) * 0.1

    # bf16 MXU operands; biases stay f32.
    x_bf = x.astype(jnp.bfloat16)
    w1_bf = w1.astype(jnp.bfloat16)
    w2_bf = w2.astype(jnp.bfloat16)

    # Deterministic ring graph: edges j -> (j+1)%N and j -> (j-1)%N.
    # For each row tile i, the two halo nodes are (i*TILE_M - 1) and
    # ((i+1)*TILE_M) % N.  Their discovery outputs are precomputed here with
    # one tiny matmul (identical dtypes to the kernel path) so the kernel never
    # multiplies zero padding.
    g = N // TILE_M
    starts = jnp.arange(g) * TILE_M
    prev_idx = (starts + N - 1) % N
    next_idx = (starts + TILE_M) % N
    h_prev_all = jnp.dot(x_bf[prev_idx], w1_bf,
                         preferred_element_type=jnp.float32) + b1     # (g, HID) f32
    h_next_all = jnp.dot(x_bf[next_idx], w1_bf,
                         preferred_element_type=jnp.float32) + b1     # (g, HID) f32
    halo_h = jnp.zeros((g, HALO_ROWS, HID), dtype=jnp.float32)
    halo_h = halo_h.at[:, 0, :].set(h_prev_all)
    halo_h = halo_h.at[:, 1, :].set(h_next_all)
    halo_h = halo_h.reshape(g * HALO_ROWS, HID)

    out = gcn_forward(x_bf, halo_h, w1_bf, b1, w2_bf, b2,
                      tile_m=TILE_M, halo_rows=HALO_ROWS)
    out = jax.block_until_ready(out)

    # Reference uses the explicit dense ring adjacency (reference only — the
    # kernel never materializes it).
    idx = jnp.arange(N)
    adj = jnp.zeros((N, N), dtype=jnp.float32)
    adj = adj.at[(idx + 1) % N, idx].set(1.0)   # edge j -> j+1
    adj = adj.at[(idx - 1) % N, idx].set(1.0)   # edge j -> j-1
    ref = gcn_reference(x_bf, adj, w1_bf, b1, w2_bf, b2)

    assert out.shape == (N, F_OUT)
    assert jnp.allclose(out, ref, atol=2e-2, rtol=2e-2), \
        float(jnp.max(jnp.abs(out - ref)))

    print("KERNEL_OK")
</pallas_src>

<mosaic_0001>
module attributes {stable_mosaic.version = 11 : i64} {
  func.func @gcn_kernel(%arg0: i32, %arg1: memref<256x128xbf16, #tpu.memory_space<vmem>>, %arg2: memref<8x128xf32, #tpu.memory_space<vmem>>, %arg3: memref<128x128xbf16, #tpu.memory_space<vmem>>, %arg4: memref<1x128xf32, #tpu.memory_space<vmem>>, %arg5: memref<128x128xbf16, #tpu.memory_space<vmem>>, %arg6: memref<1x128xf32, #tpu.memory_space<vmem>>, %arg7: memref<256x128xf32, #tpu.memory_space<vmem>>) attributes {dimension_semantics = [#tpu.dimension_semantics<parallel>], iteration_bounds = array<i64: 2>, scalar_prefetch = 0 : i64, scratch_operands = 0 : i64, tpu.core_type = #tpu.core_type<tc>, window_params = [{transform_indices = @transform_0, window_bounds = array<i64: 256, 128>}, {transform_indices = @transform_1, window_bounds = array<i64: 8, 128>}, {pipeline_mode = #tpu.pipeline_mode<synchronous>, transform_indices = @transform_2, window_bounds = array<i64: 128, 128>}, {pipeline_mode = #tpu.pipeline_mode<synchronous>, transform_indices = @transform_3, window_bounds = array<i64: 1, 128>}, {pipeline_mode = #tpu.pipeline_mode<synchronous>, transform_indices = @transform_4, window_bounds = array<i64: 128, 128>}, {pipeline_mode = #tpu.pipeline_mode<synchronous>, transform_indices = @transform_5, window_bounds = array<i64: 1, 128>}, {transform_indices = @transform_6, window_bounds = array<i64: 256, 128>}]} {
    %c0 = arith.constant 0 : index
    %c0_0 = arith.constant 0 : index
    %0 = vector.load %arg1[%c0, %c0_0] : memref<256x128xbf16, #tpu.memory_space<vmem>>, vector<256x128xbf16>
    %c0_1 = arith.constant 0 : index
    %c0_2 = arith.constant 0 : index
    %1 = vector.load %arg3[%c0_1, %c0_2] : memref<128x128xbf16, #tpu.memory_space<vmem>>, vector<128x128xbf16>
    %cst = arith.constant dense<0.000000e+00> : vector<256x128xf32>
    %2 = tpu.matmul %0, %1, %cst {dimension_numbers = #tpu.dot_dimension_numbers<[1], [0], [0], [1], [0, 0, 1, 1], [], []>} : vector<256x128xbf16>, vector<128x128xbf16>, vector<256x128xf32> -> vector<256x128xf32>
    %c0_3 = arith.constant 0 : index
    %c0_4 = arith.constant 0 : index
    %3 = vector.load %arg4[%c0_3, %c0_4] : memref<1x128xf32, #tpu.memory_space<vmem>>, vector<1x128xf32>
    %4 = vector.broadcast %3 : vector<1x128xf32> to vector<256x128xf32>
    %5 = arith.addf %2, %4 : vector<256x128xf32>
    %c0_5 = arith.constant 0 : index
    %c0_6 = arith.constant 0 : index
    %6 = vector.load %arg2[%c0_5, %c0_6] : memref<8x128xf32, #tpu.memory_space<vmem>>, vector<1x128xf32>
    %c1 = arith.constant 1 : index
    %c0_7 = arith.constant 0 : index
    %7 = vector.load %arg2[%c1, %c0_7] : memref<8x128xf32, #tpu.memory_space<vmem>>, vector<1x128xf32>
    %c1_i32 = arith.constant 1 : i32
    %8 = tpu.dynamic_rotate %5 by %c1_i32 dim 0 : vector<256x128xf32>, i32 -> vector<256x128xf32>
    %c255_i32 = arith.constant 255 : i32
    %9 = tpu.dynamic_rotate %5 by %c255_i32 dim 0 : vector<256x128xf32>, i32 -> vector<256x128xf32>
    %10 = tpu.iota {dimensions = array<i32: 0>} : vector<256x1xi32>
    %c0_i32 = arith.constant 0 : i32
    %11 = vector.broadcast %c0_i32 : i32 to vector<256x1xi32>
    %12 = arith.cmpi eq, %10, %11 : vector<256x1xi32>
    %13 = vector.shape_cast %12 : vector<256x1xi1> to vector<256x1xi1>
    %14 = vector.broadcast %13 : vector<256x1xi1> to vector<256x128xi1>
    %15 = vector.shape_cast %6 : vector<1x128xf32> to vector<1x128xf32>
    %16 = vector.broadcast %15 : vector<1x128xf32> to vector<256x128xf32>
    %17 = arith.select %14, %16, %8 : vector<256x128xi1>, vector<256x128xf32>
    %c255_i32_8 = arith.constant 255 : i32
    %18 = vector.broadcast %c255_i32_8 : i32 to vector<256x1xi32>
    %19 = arith.cmpi eq, %10, %18 : vector<256x1xi32>
    %20 = vector.shape_cast %19 : vector<256x1xi1> to vector<256x1xi1>
    %21 = vector.broadcast %20 : vector<256x1xi1> to vector<256x128xi1>
    %22 = vector.shape_cast %7 : vector<1x128xf32> to vector<1x128xf32>
    %23 = vector.broadcast %22 : vector<1x128xf32> to vector<256x128xf32>
    %24 = arith.select %21, %23, %9 : vector<256x128xi1>, vector<256x128xf32>
    %25 = arith.addf %17, %24 : vector<256x128xf32>
    %26 = arith.truncf %25 : vector<256x128xf32> to vector<256x128xbf16>
    %c0_9 = arith.constant 0 : index
    %c0_10 = arith.constant 0 : index
    %27 = vector.load %arg5[%c0_9, %c0_10] : memref<128x128xbf16, #tpu.memory_space<vmem>>, vector<128x128xbf16>
    %cst_11 = arith.constant dense<0.000000e+00> : vector<256x128xf32>
    %28 = tpu.matmul %26, %27, %cst_11 {dimension_numbers = #tpu.dot_dimension_numbers<[1], [0], [0], [1], [0, 0, 1, 1], [], []>} : vector<256x128xbf16>, vector<128x128xbf16>, vector<256x128xf32> -> vector<256x128xf32>
    %c0_12 = arith.constant 0 : index
    %c0_13 = arith.constant 0 : index
    %29 = vector.load %arg6[%c0_12, %c0_13] : memref<1x128xf32, #tpu.memory_space<vmem>>, vector<1x128xf32>
    %30 = vector.broadcast %29 : vector<1x128xf32> to vector<256x128xf32>
    %31 = arith.addf %28, %30 : vector<256x128xf32>
    %c0_14 = arith.constant 0 : index
    %c0_15 = arith.constant 0 : index
    %32 = vector.load %arg7[%c0_14, %c0_15] : memref<256x128xf32, #tpu.memory_space<vmem>>, vector<256x128xf32>
    tpu.vector_store %arg7[%c0_14, %c0_15], %31 {strides = array<i32>} : memref<256x128xf32, #tpu.memory_space<vmem>>, vector<256x128xf32>,
    return
  }
  func.func @transform_0(%arg0: i32) -> (i32, i32) {
    %c0_i32 = arith.constant 0 : i32
    %c0_i32_0 = arith.constant 0 : i32
    return %arg0, %c0_i32 : i32, i32
  }
  func.func @transform_1(%arg0: i32) -> (i32, i32) {
    %c0_i32 = arith.constant 0 : i32
    %c0_i32_0 = arith.constant 0 : i32
    return %arg0, %c0_i32 : i32, i32
  }
  func.func @transform_2(%arg0: i32) -> (i32, i32) {
    %c0_i32 = arith.constant 0 : i32
    %c0_i32_0 = arith.constant 0 : i32
    %c0_i32_1 = arith.constant 0 : i32
    return %c0_i32, %c0_i32_0 : i32, i32
  }
  func.func @transform_3(%arg0: i32) -> (i32, i32) {
    %c0_i32 = arith.constant 0 : i32
    %c0_i32_0 = arith.constant 0 : i32
    %c0_i32_1 = arith.constant 0 : i32
    return %c0_i32, %c0_i32_0 : i32, i32
  }
  func.func @transform_4(%arg0: i32) -> (i32, i32) {
    %c0_i32 = arith.constant 0 : i32
    %c0_i32_0 = arith.constant 0 : i32
    %c0_i32_1 = arith.constant 0 : i32
    return %c0_i32, %c0_i32_0 : i32, i32
  }
  func.func @transform_5(%arg0: i32) -> (i32, i32) {
    %c0_i32 = arith.constant 0 : i32
    %c0_i32_0 = arith.constant 0 : i32
    %c0_i32_1 = arith.constant 0 : i32
    return %c0_i32, %c0_i32_0 : i32, i32
  }
  func.func @transform_6(%arg0: i32) -> (i32, i32) {
    %c0_i32 = arith.constant 0 : i32
    %c0_i32_0 = arith.constant 0 : i32
    return %arg0, %c0_i32 : i32, i32
  }
}

</mosaic_0001>

<llo_original>
// kernel: tpu_custom_call.1
$region0: #{tpu_custom_call.1}
  #allocation0 [shape = 'u32[]', space=smem, size = 0x4, offset = 0x4, fixed_abs, tag = 'smem constant byte address 0x4 - core index']
  #allocation1 [shape = 'u32[72,128]{1,0:T(1,128)}', space=vmem, size = 0x9000, scoped, tag = 'internal scratch']
  %s0 = inlined_call_operand.hbm [shape: bf16[512,128], index: 0, kind: input, shape index: {}]
  %s1 = inlined_call_operand.hbm [shape: f32[16,128], index: 1, kind: input, shape index: {}]
  %s2 = inlined_call_operand.hbm [shape: bf16[128,128], index: 2, kind: input, shape index: {}]
  %s3 = inlined_call_operand.vmem [shape: f32[1,128], index: 3, kind: input, shape index: {}]
  %s4 = inlined_call_operand.hbm [shape: bf16[128,128], index: 4, kind: input, shape index: {}]
  %s5 = inlined_call_operand.vmem [shape: f32[1,128], index: 5, kind: input, shape index: {}]
  %s6 = inlined_call_operand.hbm [shape: f32[512,128], index: 6, kind: output, shape index: {}]
  %s7 = sld [smem:[#allocation0]]
  $region73: #{tpu_custom_call.1} parent=0
    _
  %s9 = ssub.s32 1, %s7
  %s10 = scalar_select 0, %s9, %s7
  $region1: #{tpu_custom_call.1} parent=0
    #allocation2 [shape = 'u8[131072]{0}', space=vmem, size = 0x20000, scoped, tag = 'input window, operand 0']
    #allocation3 [shape = 's32[2]{0}', space=sflag, size = 0x8, scoped, tag = 'scoped memory for tpu_custom_call.1']
    #allocation4 [shape = 's32[2]{0}', space=sflag, size = 0x8, scoped, tag = 'scoped memory for tpu_custom_call.1']
    #allocation5 [shape = 'u8[8192]{0}', space=vmem, size = 0x2000, scoped, tag = 'input window, operand 1']
    #allocation6 [shape = 's32[2]{0}', space=sflag, size = 0x8, scoped, tag = 'scoped memory for tpu_custom_call.1']
    #allocation7 [shape = 'u8[32768]{0}', space=vmem, size = 0x8000, scoped, tag = 'input window, operand 2, single buffered']
    #allocation8 [shape = 'u8[32768]{0}', space=vmem, size = 0x8000, scoped, tag = 'input window, operand 4, single buffered']
    #allocation9 [shape = 's32[1]{0}', space=sflag, size = 0x4, scoped, tag = 'scoped memory for tpu_custom_call.1']
    #allocation10 [shape = 'u8[262144]{0}', space=vmem, size = 0x40000, scoped, tag = 'output window, operand 0']
    %11 = vsyncpa [#allocation3], 0
    %s12 = scalar_lea.sflag [#allocation3], 1
    %13 = vsyncpa %s12, 0
    %14 = vsyncpa [#allocation6], 0
    %s15 = scalar_lea.sflag [#allocation6], 1
    %16 = vsyncpa %s15, 0
    %17 = vsyncpa [#allocation9], 0
    %18 = vsyncpa [#allocation4], 0
    %s19 = scalar_lea.sflag [#allocation4], 1
    %20 = vsyncpa %s19, 0
    loop: start=0, step=1, limit=4
    $region2: #{tpu_custom_call.1} parent=1 // loop_pre_header
      _
    $region3: #{tpu_custom_call.1} parent=1 // loop_header
      %s22 = sphi 0, %s26
      %p23 = scmp.ge.s32.totalorder %s22, 4
      %s32 = sphi 0, %s34
      %s35 = sphi 0, %s32
      %s36 = sphi 0, %s35
      %s52 = sphi 0, %s36
      %s58 = sphi 0, %s60
      %s61 = sphi 0, %s58
      %s62 = sphi 0, %s61
      %s78 = sphi 0, %s62
      %s82 = sphi 0, %s82
      %s84 = sphi 0, %s82
      %s85 = sphi 0, %s84
      %s99 = sphi 0, %s85
      %s103 = sphi 0, %s103
      %s105 = sphi 0, %s103
      %s106 = sphi 0, %s105
      %s120 = sphi 0, %s106
      %s124 = sphi 0, %s124
      %s126 = sphi 0, %s124
      %s127 = sphi 0, %s126
      %s141 = sphi 0, %s127
      %s145 = sphi 0, %s145
      %s147 = sphi 0, %s145
      %s148 = sphi 0, %s147
      %s162 = sphi 0, %s148
      %s168 = sphi 0, %s170
      %s171 = sphi 0, %s168
      %s172 = sphi 0, %s171
      %s188 = sphi 0, %s172
    $region4: #{tpu_custom_call.1} parent=1 // loop_header_branch
      %25 = sbr.rel (%p23) target = $region8
    $region5: #{tpu_custom_call.1} parent=1 // loop_body
      %s27 = ssub.s32 %s22, 1
      %s28 = ssub.s32 %s22, 2
      %s29 = sadd.s32 %s22, 1
      %s30 = ssub.s32 %s22, %s29
      %p31 = scmp.eq.s32.totalorder %s30, 0
      %s33 = sadd.s32 %s32, 1
      %s34 = scalar_select %p31, %s32, %s33
      %p37 = pneg %p31
      %p38 = scmp.eq.s32.totalorder %s22, 1
      %p39 = por %p37, %p38
      %p40 = scmp.ne.s32.totalorder %s32, %s35
      %p41 = scmp.eq.s32.totalorder %s22, 0
      %p42 = por %p40, %p41
      %p43 = scmp.ne.s32.totalorder %s32, %s35
      %p44 = scmp.eq.s32.totalorder %s27, 1
      %p45 = por %p43, %p44
      %p46 = scmp.ne.s32.totalorder %s35, %s36
      %p47 = scmp.eq.s32.totalorder %s27, 0
      %p48 = por %p46, %p47
      %p49 = scmp.ne.s32.totalorder %s35, %s36
      %p50 = scmp.eq.s32.totalorder %s28, 1
      %p51 = por %p49, %p50
      %p53 = scmp.ne.s32.totalorder %s36, %s52
      %p54 = scmp.eq.s32.totalorder %s28, 0
      %p55 = por %p53, %p54
      %s56 = ssub.s32 %s22, %s29
      %p57 = scmp.eq.s32.totalorder %s56, 0
      %s59 = sadd.s32 %s58, 1
      %s60 = scalar_select %p57, %s58, %s59
      %p63 = pneg %p57
      %p64 = scmp.eq.s32.totalorder %s22, 1
      %p65 = por %p63, %p64
      %p66 = scmp.ne.s32.totalorder %s58, %s61
      %p67 = scmp.eq.s32.totalorder %s22, 0
      %p68 = por %p66, %p67
      %p69 = scmp.ne.s32.totalorder %s58, %s61
      %p70 = scmp.eq.s32.totalorder %s27, 1
      %p71 = por %p69, %p70
      %p72 = scmp.ne.s32.totalorder %s61, %s62
      %p73 = scmp.eq.s32.totalorder %s27, 0
      %p74 = por %p72, %p73
      %p75 = scmp.ne.s32.totalorder %s61, %s62
      %p76 = scmp.eq.s32.totalorder %s28, 1
      %p77 = por %p75, %p76
      %p79 = scmp.ne.s32.totalorder %s62, %s78
      %p80 = scmp.eq.s32.totalorder %s28, 0
      %p81 = por %p79, %p80
      %s83 = sadd.s32 %s82, 1
      %p86 = scmp.eq.s32.totalorder %s22, 1
      %p87 = scmp.ne.s32.totalorder %s82, %s84
      %p88 = scmp.eq.s32.totalorder %s22, 0
      %p89 = por %p87, %p88
      %p90 = scmp.ne.s32.totalorder %s82, %s84
      %p91 = scmp.eq.s32.totalorder %s27, 1
      %p92 = por %p90, %p91
      %p93 = scmp.ne.s32.totalorder %s84, %s85
      %p94 = scmp.eq.s32.totalorder %s27, 0
      %p95 = por %p93, %p94
      %p96 = scmp.ne.s32.totalorder %s84, %s85
      %p97 = scmp.eq.s32.totalorder %s28, 1
      %p98 = por %p96, %p97
      %p100 = scmp.ne.s32.totalorder %s85, %s99
      %p101 = scmp.eq.s32.totalorder %s28, 0
      %p102 = por %p100, %p101
      %s104 = sadd.s32 %s103, 1
      %p107 = scmp.eq.s32.totalorder %s22, 1
      %p108 = scmp.ne.s32.totalorder %s103, %s105
      %p109 = scmp.eq.s32.totalorder %s22, 0
      %p110 = por %p108, %p109
      %p111 = scmp.ne.s32.totalorder %s103, %s105
      %p112 = scmp.eq.s32.totalorder %s27, 1
      %p113 = por %p111, %p112
      %p114 = scmp.ne.s32.totalorder %s105, %s106
      %p115 = scmp.eq.s32.totalorder %s27, 0
      %p116 = por %p114, %p115
      %p117 = scmp.ne.s32.totalorder %s105, %s106
      %p118 = scmp.eq.s32.totalorder %s28, 1
      %p119 = por %p117, %p118
      %p121 = scmp.ne.s32.totalorder %s106, %s120
      %p122 = scmp.eq.s32.totalorder %s28, 0
      %p123 = por %p121, %p122
      %s125 = sadd.s32 %s124, 1
      %p128 = scmp.eq.s32.totalorder %s22, 1
      %p129 = scmp.ne.s32.totalorder %s124, %s126
      %p130 = scmp.eq.s32.totalorder %s22, 0
      %p131 = por %p129, %p130
      %p132 = scmp.ne.s32.totalorder %s124, %s126
      %p133 = scmp.eq.s32.totalorder %s27, 1
      %p134 = por %p132, %p133
      %p135 = scmp.ne.s32.totalorder %s126, %s127
      %p136 = scmp.eq.s32.totalorder %s27, 0
      %p137 = por %p135, %p136
      %p138 = scmp.ne.s32.totalorder %s126, %s127
      %p139 = scmp.eq.s32.totalorder %s28, 1
      %p140 = por %p138, %p139
      %p142 = scmp.ne.s32.totalorder %s127, %s141
      %p143 = scmp.eq.s32.totalorder %s28, 0
      %p144 = por %p142, %p143
      %s146 = sadd.s32 %s145, 1
      %p149 = scmp.eq.s32.totalorder %s22, 1
      %p150 = scmp.ne.s32.totalorder %s145, %s147
      %p151 = scmp.eq.s32.totalorder %s22, 0
      %p152 = por %p150, %p151
      %p153 = scmp.ne.s32.totalorder %s145, %s147
      %p154 = scmp.eq.s32.totalorder %s27, 1
      %p155 = por %p153, %p154
      %p156 = scmp.ne.s32.totalorder %s147, %s148
      %p157 = scmp.eq.s32.totalorder %s27, 0
      %p158 = por %p156, %p157
      %p159 = scmp.ne.s32.totalorder %s147, %s148
      %p160 = scmp.eq.s32.totalorder %s28, 1
      %p161 = por %p159, %p160
      %p163 = scmp.ne.s32.totalorder %s148, %s162
      %p164 = scmp.eq.s32.totalorder %s28, 0
      %p165 = por %p163, %p164
      %s166 = ssub.s32 %s22, %s29
      %p167 = scmp.eq.s32.totalorder %s166, 0
      %s169 = sadd.s32 %s168, 1
      %s170 = scalar_select %p167, %s168, %s169
      %p173 = pneg %p167
      %p174 = scmp.eq.s32.totalorder %s22, 1
      %p175 = por %p173, %p174
      %p176 = scmp.ne.s32.totalorder %s168, %s171
      %p177 = scmp.eq.s32.totalorder %s22, 0
      %p178 = por %p176, %p177
      %p179 = scmp.ne.s32.totalorder %s168, %s171
      %p180 = scmp.eq.s32.totalorder %s27, 1
      %p181 = por %p179, %p180
      %p182 = scmp.ne.s32.totalorder %s171, %s172
      %p183 = scmp.eq.s32.totalorder %s27, 0
      %p184 = por %p182, %p183
      %p185 = scmp.ne.s32.totalorder %s171, %s172
      %p186 = scmp.eq.s32.totalorder %s28, 1
      %p187 = por %p185, %p186
      %p189 = scmp.ne.s32.totalorder %s172, %s188
      %p190 = scmp.eq.s32.totalorder %s28, 0
      %p191 = por %p189, %p190
      %p192 = scmp.le.s32.totalorder 1, %s22
      %p193 = scmp.lt.s32.totalorder %s22, 3
      %p194 = pnand %p192, %p193
      %p195 = pneg %p194
      // Predicated region
      $region9: #{tpu_custom_call.1} parent=5 // pred_check
        _
      $region10: #{tpu_custom_call.1} parent=5 // pred_check_branch
        %197 = sbr.rel (%p194) target = $region12
      $region11: #{tpu_custom_call.1} parent=5 // pred_region
        %s198 = ssub.s32 %s22, 1
        // Predicated region
        $region13: #{tpu_custom_call.1} parent=11 // pred_check
          %p199 = pneg %p95
        $region14: #{tpu_custom_call.1} parent=11 // pred_check_branch
          %201 = sbr.rel (%p199) target = $region16
        $region15: #{tpu_custom_call.1} parent=11 // pred_region
          %203 = vsyncadd [#allocation6], 0
          %s204 = sshll.u32 %s2, 4
          %s205 = int_to_ptr.hbm [resolvable:$true] %s204
          %s206 = sshll.u32 [#allocation7], 4
          %s207 = int_to_ptr.vmem [resolvable:$true] %s206
          %212 = dma.hbm_to_vmem [thread:$0]  %s205, 1024, %s207, [#allocation6], 64, 64, 4
        $region16: #{tpu_custom_call.1} parent=11 // pred_fallthru
          _
        // Predicated region
        $region17: #{tpu_custom_call.1} parent=11 // pred_check
          %p213 = pneg %p116
        $region18: #{tpu_custom_call.1} parent=11 // pred_check_branch
          %215 = sbr.rel (%p213) target = $region20
        $region19: #{tpu_custom_call.1} parent=11 // pred_region
          _
        $region20: #{tpu_custom_call.1} parent=11 // pred_fallthru
          _
        // Predicated region
        $region21: #{tpu_custom_call.1} parent=11 // pred_check
          %p216 = pneg %p137
        $region22: #{tpu_custom_call.1} parent=11 // pred_check_branch
          %218 = sbr.rel (%p216) target = $region24
        $region23: #{tpu_custom_call.1} parent=11 // pred_region
          %220 = vsyncadd [#allocation9], 0
          %s221 = sshll.u32 %s4, 4
          %s222 = int_to_ptr.hbm [resolvable:$true] %s221
          %s223 = sshll.u32 [#allocation8], 4
          %s224 = int_to_ptr.vmem [resolvable:$true] %s223
          %229 = dma.hbm_to_vmem [thread:$0]  %s222, 1024, %s224, [#allocation9], 64, 64, 4
        $region24: #{tpu_custom_call.1} parent=11 // pred_fallthru
          _
        // Predicated region
        $region25: #{tpu_custom_call.1} parent=11 // pred_check
          %p230 = pneg %p158
        $region26: #{tpu_custom_call.1} parent=11 // pred_check_branch
          %232 = sbr.rel (%p230) target = $region28
        $region27: #{tpu_custom_call.1} parent=11 // pred_region
          _
        $region28: #{tpu_custom_call.1} parent=11 // pred_fallthru
          _
      $region12: #{tpu_custom_call.1} parent=5 // pred_fallthru
        _
      %p233 = scmp.lt.s32.totalorder %s22, 2
      // Predicated region
      $region29: #{tpu_custom_call.1} parent=5 // pred_check
        %p234 = pneg %p233
      $region30: #{tpu_custom_call.1} parent=5 // pred_check_branch
        %236 = sbr.rel (%p234) target = $region32
      $region31: #{tpu_custom_call.1} parent=5 // pred_region
        // Predicated region
        $region33: #{tpu_custom_call.1} parent=31 // pred_check
          %p237 = pneg %p42
        $region34: #{tpu_custom_call.1} parent=31 // pred_check_branch
          %239 = sbr.rel (%p237) target = $region36
        $region35: #{tpu_custom_call.1} parent=31 // pred_region
          %s240 = sand.u32 %s32, 1
          %s241 = scalar_lea.sflag [#allocation3], %s240
          %s242 = sand.u32 %s32, 1
          %s243 = smul.addr %s242, 128
          %s244 = scalar_lea.vmem [#allocation2], %s243
          %s245 = smul.u32 32, %s22
          %247 = vsyncadd %s241, 0
          %s248 = smul.addr %s245, 4
          %s249 = scalar_lea.hbm %s0, %s248
          %s250 = sshll.u32 %s249, 4
          %s251 = int_to_ptr.hbm [resolvable:$true] %s250
          %s252 = sshll.u32 %s244, 4
          %s253 = int_to_ptr.vmem [resolvable:$true] %s252
          %258 = dma.hbm_to_vmem [thread:$0]  %s251, 2048, %s253, %s241, 64, 64, 4
        $region36: #{tpu_custom_call.1} parent=31 // pred_fallthru
          _
        // Predicated region
        $region37: #{tpu_custom_call.1} parent=31 // pred_check
          %p259 = pneg %p68
        $region38: #{tpu_custom_call.1} parent=31 // pred_check_branch
          %261 = sbr.rel (%p259) target = $region40
        $region39: #{tpu_custom_call.1} parent=31 // pred_region
          %s262 = sand.u32 %s22, 1
          %s263 = scalar_lea.sflag [#allocation6], %s262
          %s264 = sand.u32 %s58, 1
          %s265 = smul.addr %s264, 8
          %s266 = scalar_lea.vmem [#allocation5], %s265
          %268 = vsyncadd %s263, 0
          %s269 = smul.addr %s22, 8
          %s270 = scalar_lea.hbm %s1, %s269
          %s272 = sshll.u32 %s270, 4
          %s273 = int_to_ptr.hbm [resolvable:$true] %s272
          %s274 = sshll.u32 %s266, 4
          %s275 = int_to_ptr.vmem [resolvable:$true] %s274
          %277 = dma.hbm_to_vmem [thread:$0]  %s273, 128, %s275, %s263
        $region40: #{tpu_custom_call.1} parent=31 // pred_fallthru
          _
      $region32: #{tpu_custom_call.1} parent=5 // pred_fallthru
        _
      %p278 = scmp.le.s32.totalorder 1, %s22
      %p279 = scmp.lt.s32.totalorder %s22, 3
      %p280 = pnand %p278, %p279
      %p281 = pneg %p280
      // Predicated region
      $region41: #{tpu_custom_call.1} parent=5 // pred_check
        _
      $region42: #{tpu_custom_call.1} parent=5 // pred_check_branch
        %283 = sbr.rel (%p280) target = $region44
      $region43: #{tpu_custom_call.1} parent=5 // pred_region
        %s284 = ssub.s32 %s22, 1
        %s285 = sand.u32 %s35, 1
        %s286 = scalar_lea.sflag [#allocation3], %s285
        %s287 = sand.u32 %s35, 1
        %s288 = smul.addr %s287, 128
        %s289 = scalar_lea.vmem [#allocation2], %s288
        // Predicated region
        $region45: #{tpu_custom_call.1} parent=43 // pred_check
          %p290 = pneg %p48
        $region46: #{tpu_custom_call.1} parent=43 // pred_check_branch
          %292 = sbr.rel (%p290) target = $region48
        $region47: #{tpu_custom_call.1} parent=43 // pred_region
          %294 = dma.done %s286, 2048
        $region48: #{tpu_custom_call.1} parent=43 // pred_fallthru
          _
        %s295 = sand.u32 %s27, 1
        %s296 = scalar_lea.sflag [#allocation6], %s295
        %s297 = sand.u32 %s61, 1
        %s298 = smul.addr %s297, 8
        %s299 = scalar_lea.vmem [#allocation5], %s298
        // Predicated region
        $region49: #{tpu_custom_call.1} parent=43 // pred_check
          %p300 = pneg %p74
        $region50: #{tpu_custom_call.1} parent=43 // pred_check_branch
          %302 = sbr.rel (%p300) target = $region52
        $region51: #{tpu_custom_call.1} parent=43 // pred_region
          %304 = dma.done %s296, 128
        $region52: #{tpu_custom_call.1} parent=43 // pred_fallthru
          _
        // Predicated region
        $region53: #{tpu_custom_call.1} parent=43 // pred_check
          %p305 = pneg %p95
        $region54: #{tpu_custom_call.1} parent=43 // pred_check_branch
          %307 = sbr.rel (%p305) target = $region56
        $region55: #{tpu_custom_call.1} parent=43 // pred_region
          %309 = dma.done [#allocation6], 1024
        $region56: #{tpu_custom_call.1} parent=43 // pred_fallthru
          _
        // Predicated region
        $region57: #{tpu_custom_call.1} parent=43 // pred_check
          %p310 = pneg %p137
        $region58: #{tpu_custom_call.1} parent=43 // pred_check_branch
          %312 = sbr.rel (%p310) target = $region60
        $region59: #{tpu_custom_call.1} parent=43 // pred_region
          %314 = dma.done [#allocation9], 1024
        $region60: #{tpu_custom_call.1} parent=43 // pred_fallthru
          _
        %s315 = sand.u32 %s35, 1
        %s316 = scalar_lea.sflag [#allocation3], %s315
        %s317 = sand.u32 %s35, 1
        %s318 = smul.addr %s317, 128
        %s319 = scalar_lea.vmem [#allocation2], %s318
        %p320 = pneg %p48
        %p321 = pneg %p45
        %s322 = sand.u32 %s27, 1
        %s323 = scalar_lea.sflag [#allocation6], %s322
        %s324 = sand.u32 %s61, 1
        %s325 = smul.addr %s324, 8
        %s326 = scalar_lea.vmem [#allocation5], %s325
        %p327 = pneg %p74
        %p328 = pneg %p71
        %p329 = pneg %p95
        %p330 = pneg %p92
        %p331 = pneg %p116
        %p332 = pneg %p113
        %p333 = pneg %p137
        %p334 = pneg %p134
        %p335 = pneg %p158
        %p336 = pneg %p155
        %p337 = pneg %p184
        %p338 = pneg %p181
        %s339 = sand.u32 %s171, 1
        %s340 = scalar_lea.sflag [#allocation4], %s339
        %s341 = sand.u32 %s171, 1
        %s342 = smul.addr %s341, 256
        %s343 = scalar_lea.vmem [#allocation10], %s342
        %s344 = smul.u32 32, %s27
        %s345 = smul.u32 32, %s27
        %v346 = vld [vmem:[%s289] sm:$0xf]
        %v347 = vld [vmem:[%s289 + $0x4] sm:$0xf]
        %v348 = vld [vmem:[%s289 + $0x8] sm:$0xf]
        %v349 = vld [vmem:[%s289 + $0xc] sm:$0xf]
        %v350 = vld [vmem:[%s289 + $0x10] sm:$0xf]
        %v351 = vld [vmem:[%s289 + $0x14] sm:$0xf]
        %v352 = vld [vmem:[%s289 + $0x18] sm:$0xf]
        %v353 = vld [vmem:[%s289 + $0x1c] sm:$0xf]
        %v354 = vld [vmem:[%s289 + $0x20] sm:$0xf]
        %v355 = vld [vmem:[%s289 + $0x24] sm:$0xf]
        %v356 = vld [vmem:[%s289 + $0x28] sm:$0xf]
        %v357 = vld [vmem:[%s289 + $0x2c] sm:$0xf]
        %v358 = vld [vmem:[%s289 + $0x30] sm:$0xf]
        %v359 = vld [vmem:[%s289 + $0x34] sm:$0xf]
        %v360 = vld [vmem:[%s289 + $0x38] sm:$0xf]
        %v361 = vld [vmem:[%s289 + $0x3c] sm:$0xf]
        %v362 = vld [vmem:[%s289 + $0x40] sm:$0xf]
        %v363 = vld [vmem:[%s289 + $0x44] sm:$0xf]
        %v364 = vld [vmem:[%s289 + $0x48] sm:$0xf]
        %v365 = vld [vmem:[%s289 + $0x4c] sm:$0xf]
        %v366 = vld [vmem:[%s289 + $0x50] sm:$0xf]
        %v367 = vld [vmem:[%s289 + $0x54] sm:$0xf]
        %v368 = vld [vmem:[%s289 + $0x58] sm:$0xf]
        %v369 = vld [vmem:[%s289 + $0x5c] sm:$0xf]
        %v370 = vld [vmem:[%s289 + $0x60] sm:$0xf]
        %v371 = vld [vmem:[%s289 + $0x64] sm:$0xf]
        %v372 = vld [vmem:[%s289 + $0x68] sm:$0xf]
        %v373 = vld [vmem:[%s289 + $0x6c] sm:$0xf]
        %v374 = vld [vmem:[%s289 + $0x70] sm:$0xf]
        %v375 = vld [vmem:[%s289 + $0x74] sm:$0xf]
        %v376 = vld [vmem:[%s289 + $0x78] sm:$0xf]
        %v377 = vld [vmem:[%s289 + $0x7c] sm:$0xf]
        %v378 = vld [vmem:[#allocation7] sm:$0xf]
        %v379 = vld [vmem:[#allocation7 + $0x4] sm:$0xf]
        %v380 = vld [vmem:[#allocation7 + $0x8] sm:$0xf]
        %v381 = vld [vmem:[#allocation7 + $0xc] sm:$0xf]
        %v382 = vld [vmem:[#allocation7 + $0x10] sm:$0xf]
        %v383 = vld [vmem:[#allocation7 + $0x14] sm:$0xf]
        %v384 = vld [vmem:[#allocation7 + $0x18] sm:$0xf]
        %v385 = vld [vmem:[#allocation7 + $0x1c] sm:$0xf]
        %v386 = vld [vmem:[#allocation7 + $0x20] sm:$0xf]
        %v387 = vld [vmem:[#allocation7 + $0x24] sm:$0xf]
        %v388 = vld [vmem:[#allocation7 + $0x28] sm:$0xf]
        %v389 = vld [vmem:[#allocation7 + $0x2c] sm:$0xf]
        %v390 = vld [vmem:[#allocation7 + $0x30] sm:$0xf]
        %v391 = vld [vmem:[#allocation7 + $0x34] sm:$0xf]
        %v392 = vld [vmem:[#allocation7 + $0x38] sm:$0xf]
        %v393 = vld [vmem:[#allocation7 + $0x3c] sm:$0xf]
        %v394 = vld [vmem:[%s3] sm:$0x1]
        %v396 = vperm.slane %v394, 0
        %v430 = vunpack.c.l.b16 %v346
        %v431 = vunpack.c.l.b16 %v347
        %v432 = vunpack.c.l.b16 %v348
        %v433 = vunpack.c.l.b16 %v349
        %v434 = vunpack.c.l.b16 %v350
        %v435 = vunpack.c.l.b16 %v351
        %v436 = vunpack.c.l.b16 %v352
        %v437 = vunpack.c.l.b16 %v353
        %v438 = vunpack.c.l.b16 %v354
        %v439 = vunpack.c.l.b16 %v355
        %v440 = vunpack.c.l.b16 %v356
        %v441 = vunpack.c.l.b16 %v357
        %v442 = vunpack.c.l.b16 %v358
        %v443 = vunpack.c.l.b16 %v359
        %v444 = vunpack.c.l.b16 %v360
        %v445 = vunpack.c.l.b16 %v361
        %v446 = vunpack.c.l.b16 %v362
        %v447 = vunpack.c.l.b16 %v363
        %v448 = vunpack.c.l.b16 %v364
        %v449 = vunpack.c.l.b16 %v365
        %v450 = vunpack.c.l.b16 %v366
        %v451 = vunpack.c.l.b16 %v367
        %v452 = vunpack.c.l.b16 %v368
        %v453 = vunpack.c.l.b16 %v369
        %v454 = vunpack.c.l.b16 %v370
        %v455 = vunpack.c.l.b16 %v371
        %v456 = vunpack.c.l.b16 %v372
        %v457 = vunpack.c.l.b16 %v373
        %v458 = vunpack.c.l.b16 %v374
        %v459 = vunpack.c.l.b16 %v375
        %v460 = vunpack.c.l.b16 %v376
        %v461 = vunpack.c.l.b16 %v377
        %v462 = vpack.c.b16 %v431, %v430
        %v463 = vpack.c.b16 %v433, %v432
        %v464 = vpack.c.b16 %v435, %v434
        %v465 = vpack.c.b16 %v437, %v436
        %v466 = vpack.c.b16 %v439, %v438
        %v467 = vpack.c.b16 %v441, %v440
        %v468 = vpack.c.b16 %v443, %v442
        %v469 = vpack.c.b16 %v445, %v444
        %v470 = vpack.c.b16 %v447, %v446
        %v471 = vpack.c.b16 %v449, %v448
        %v472 = vpack.c.b16 %v451, %v450
        %v473 = vpack.c.b16 %v453, %v452
        %v474 = vpack.c.b16 %v455, %v454
        %v475 = vpack.c.b16 %v457, %v456
        %v476 = vpack.c.b16 %v459, %v458
        %v477 = vpack.c.b16 %v461, %v460
        %v510 = vunpack.c.l.b16 %v378
        %v511 = vunpack.c.l.b16 %v379
        %v512 = vunpack.c.l.b16 %v380
        %v513 = vunpack.c.l.b16 %v381
        %v514 = vunpack.c.l.b16 %v382
        %v515 = vunpack.c.l.b16 %v383
        %v516 = vunpack.c.l.b16 %v384
        %v517 = vunpack.c.l.b16 %v385
        %v518 = vunpack.c.l.b16 %v386
        %v519 = vunpack.c.l.b16 %v387
        %v520 = vunpack.c.l.b16 %v388
        %v521 = vunpack.c.l.b16 %v389
        %v522 = vunpack.c.l.b16 %v390
        %v523 = vunpack.c.l.b16 %v391
        %v524 = vunpack.c.l.b16 %v392
        %v525 = vunpack.c.l.b16 %v393
        %v526 = vpack.c.b16 %v511, %v510
        %v527 = vpack.c.b16 %v513, %v512
        %v528 = vpack.c.b16 %v515, %v514
        %v529 = vpack.c.b16 %v517, %v516
        %v530 = vpack.c.b16 %v519, %v518
        %v531 = vpack.c.b16 %v521, %v520
        %v532 = vpack.c.b16 %v523, %v522
        %v533 = vpack.c.b16 %v525, %v524
        %542 = vmatpush.bf16.msra.mxu0 %v533
        %543 = vmatpush.bf16.msra.mxu0 %v532
        %544 = vmatpush.bf16.msra.mxu0 %v531
        %545 = vmatpush.bf16.msra.mxu0 %v530
        %546 = vmatpush.bf16.msra.mxu0 %v529
        %547 = vmatpush.bf16.msra.mxu0 %v528
        %548 = vmatpush.bf16.msra.mxu0 %v527
        %549 = vmatpush.bf16.msra.mxu0 %v526
        %550 = vmatmul.bf16.gmra.mxu0 %v462
        %v551 = vpop.f32.mrf.mxu0
        %v552 = vadd.f32 %v396, %v551
        %v553 = vpop.f32.mrf.mxu0
        %v554 = vadd.f32 %v396, %v553
        %555 = vmatmul.bf16.gmra.mxu0 %v463
        %v556 = vpop.f32.mrf.mxu0
        %v557 = vadd.f32 %v396, %v556
        %v558 = vpop.f32.mrf.mxu0
        %v559 = vadd.f32 %v396, %v558
        %560 = vmatmul.bf16.gmra.mxu0 %v464
        %v561 = vpop.f32.mrf.mxu0
        %v562 = vadd.f32 %v396, %v561
        %v563 = vpop.f32.mrf.mxu0
        %v564 = vadd.f32 %v396, %v563
        %565 = vmatmul.bf16.gmra.mxu0 %v465
        %v566 = vpop.f32.mrf.mxu0
        %v567 = vadd.f32 %v396, %v566
        %v568 = vpop.f32.mrf.mxu0
        %v569 = vadd.f32 %v396, %v568
        %570 = vmatmul.bf16.gmra.mxu0 %v466
        %v571 = vpop.f32.mrf.mxu0
        %v572 = vadd.f32 %v396, %v571
        %v573 = vpop.f32.mrf.mxu0
        %v574 = vadd.f32 %v396, %v573
        %575 = vmatmul.bf16.gmra.mxu0 %v467
        %v576 = vpop.f32.mrf.mxu0
        %v577 = vadd.f32 %v396, %v576
        %v578 = vpop.f32.mrf.mxu0
        %v579 = vadd.f32 %v396, %v578
        %580 = vmatmul.bf16.gmra.mxu0 %v468
        %v581 = vpop.f32.mrf.mxu0
        %v582 = vadd.f32 %v396, %v581
        %v583 = vpop.f32.mrf.mxu0
        %v584 = vadd.f32 %v396, %v583
        %585 = vmatmul.bf16.gmra.mxu0 %v469
        %v586 = vpop.f32.mrf.mxu0
        %v587 = vadd.f32 %v396, %v586
        %v588 = vpop.f32.mrf.mxu0
        %v589 = vadd.f32 %v396, %v588
        %590 = vmatmul.bf16.gmra.mxu0 %v470
        %v591 = vpop.f32.mrf.mxu0
        %v592 = vadd.f32 %v396, %v591
        %v593 = vpop.f32.mrf.mxu0
        %v594 = vadd.f32 %v396, %v593
        %595 = vmatmul.bf16.gmra.mxu0 %v471
        %v596 = vpop.f32.mrf.mxu0
        %v597 = vadd.f32 %v396, %v596
        %v598 = vpop.f32.mrf.mxu0
        %v599 = vadd.f32 %v396, %v598
        %600 = vmatmul.bf16.gmra.mxu0 %v472
        %v601 = vpop.f32.mrf.mxu0
        %v602 = vadd.f32 %v396, %v601
        %v603 = vpop.f32.mrf.mxu0
        %v604 = vadd.f32 %v396, %v603
        %605 = vmatmul.bf16.gmra.mxu0 %v473
        %v606 = vpop.f32.mrf.mxu0
        %v607 = vadd.f32 %v396, %v606
        %v608 = vpop.f32.mrf.mxu0
        %v609 = vadd.f32 %v396, %v608
        %610 = vmatmul.bf16.gmra.mxu0 %v474
        %v611 = vpop.f32.mrf.mxu0
        %v612 = vadd.f32 %v396, %v611
        %v613 = vpop.f32.mrf.mxu0
        %v614 = vadd.f32 %v396, %v613
        %615 = vmatmul.bf16.gmra.mxu0 %v475
        %v616 = vpop.f32.mrf.mxu0
        %v617 = vadd.f32 %v396, %v616
        %v618 = vpop.f32.mrf.mxu0
        %v619 = vadd.f32 %v396, %v618
        %620 = vmatmul.bf16.gmra.mxu0 %v476
        %v621 = vpop.f32.mrf.mxu0
        %v622 = vadd.f32 %v396, %v621
        %v623 = vpop.f32.mrf.mxu0
        %v624 = vadd.f32 %v396, %v623
        %625 = vmatmul.bf16.gmra.mxu0 %v477
        %v626 = vpop.f32.mrf.mxu0
        %v627 = vadd.f32 %v396, %v626
        %v628 = vpop.f32.mrf.mxu0
        %v629 = vadd.f32 %v396, %v628
        %630 = vdwg.mxu0
        %v631 = vld [vmem:[%s299] sm:$0x1]
        %v632 = vld [vmem:[%s299 + $0x1] sm:$0x1]
        %v633 = vrot.slane %v552, 7
        %v634 = vrot.slane %v554, 7
        %v635 = vrot.slane %v557, 7
        %v636 = vrot.slane %v559, 7
        %v637 = vrot.slane %v562, 7
        %v638 = vrot.slane %v564, 7
        %v639 = vrot.slane %v567, 7
        %v640 = vrot.slane %v569, 7
        %v641 = vrot.slane %v572, 7
        %v642 = vrot.slane %v574, 7
        %v643 = vrot.slane %v577, 7
        %v644 = vrot.slane %v579, 7
        %v645 = vrot.slane %v582, 7
        %v646 = vrot.slane %v584, 7
        %v647 = vrot.slane %v587, 7
        %v648 = vrot.slane %v589, 7
        %v649 = vrot.slane %v592, 7
        %v650 = vrot.slane %v594, 7
        %v651 = vrot.slane %v597, 7
        %v652 = vrot.slane %v599, 7
        %v653 = vrot.slane %v602, 7
        %v654 = vrot.slane %v604, 7
        %v655 = vrot.slane %v607, 7
        %v656 = vrot.slane %v609, 7
        %v657 = vrot.slane %v612, 7
        %v658 = vrot.slane %v614, 7
        %v659 = vrot.slane %v617, 7
        %v660 = vrot.slane %v619, 7
        %v661 = vrot.slane %v622, 7
        %v662 = vrot.slane %v624, 7
        %v663 = vrot.slane %v627, 7
        %v664 = vrot.slane %v629, 7
        %v665 = vlaneseq
        %v666 = vshrl.u32 %v665, 7
        %vm667 = vcmp.lt.s32.totalorder %v666, 1
        %v668 = vsel %vm667, %v663, %v664
        %v669 = vsel %vm667, %v662, %v663
        %v670 = vsel %vm667, %v661, %v662
        %v671 = vsel %vm667, %v660, %v661
        %v672 = vsel %vm667, %v659, %v660
        %v673 = vsel %vm667, %v658, %v659
        %v674 = vsel %vm667, %v657, %v658
        %v675 = vsel %vm667, %v656, %v657
        %v676 = vsel %vm667, %v655, %v656
        %v677 = vsel %vm667, %v654, %v655
        %v678 = vsel %vm667, %v653, %v654
        %v679 = vsel %vm667, %v652, %v653
        %v680 = vsel %vm667, %v651, %v652
        %v681 = vsel %vm667, %v650, %v651
        %v682 = vsel %vm667, %v649, %v650
        %v683 = vsel %vm667, %v648, %v649
        %v684 = vsel %vm667, %v647, %v648
        %v685 = vsel %vm667, %v646, %v647
        %v686 = vsel %vm667, %v645, %v646
        %v687 = vsel %vm667, %v644, %v645
        %v688 = vsel %vm667, %v643, %v644
        %v689 = vsel %vm667, %v642, %v643
        %v690 = vsel %vm667, %v641, %v642
        %v691 = vsel %vm667, %v640, %v641
        %v692 = vsel %vm667, %v639, %v640
        %v693 = vsel %vm667, %v638, %v639
        %v694 = vsel %vm667, %v637, %v638
        %v695 = vsel %vm667, %v636, %v637
        %v696 = vsel %vm667, %v635, %v636
        %v697 = vsel %vm667, %v634, %v635
        %v698 = vsel %vm667, %v633, %v634
        %v699 = vsel %vm667, %v664, %v633
        %v700 = vrot.slane %v552, 1
        %v701 = vrot.slane %v554, 1
        %v702 = vrot.slane %v557, 1
        %v703 = vrot.slane %v559, 1
        %v704 = vrot.slane %v562, 1
        %v705 = vrot.slane %v564, 1
        %v706 = vrot.slane %v567, 1
        %v707 = vrot.slane %v569, 1
        %v708 = vrot.slane %v572, 1
        %v709 = vrot.slane %v574, 1
        %v710 = vrot.slane %v577, 1
        %v711 = vrot.slane %v579, 1
        %v712 = vrot.slane %v582, 1
        %v713 = vrot.slane %v584, 1
        %v714 = vrot.slane %v587, 1
        %v715 = vrot.slane %v589, 1
        %v716 = vrot.slane %v592, 1
        %v717 = vrot.slane %v594, 1
        %v718 = vrot.slane %v597, 1
        %v719 = vrot.slane %v599, 1
        %v720 = vrot.slane %v602, 1
        %v721 = vrot.slane %v604, 1
        %v722 = vrot.slane %v607, 1
        %v723 = vrot.slane %v609, 1
        %v724 = vrot.slane %v612, 1
        %v725 = vrot.slane %v614, 1
        %v726 = vrot.slane %v617, 1
        %v727 = vrot.slane %v619, 1
        %v728 = vrot.slane %v622, 1
        %v729 = vrot.slane %v624, 1
        %v730 = vrot.slane %v627, 1
        %v731 = vrot.slane %v629, 1
        %vm732 = vcmp.lt.s32.totalorder %v666, 7
        %v733 = vsel %vm732, %v730, %v731
        %v734 = vsel %vm732, %v729, %v730
        %v735 = vsel %vm732, %v728, %v729
        %v736 = vsel %vm732, %v727, %v728
        %v737 = vsel %vm732, %v726, %v727
        %v738 = vsel %vm732, %v725, %v726
        %v739 = vsel %vm732, %v724, %v725
        %v740 = vsel %vm732, %v723, %v724
        %v741 = vsel %vm732, %v722, %v723
        %v742 = vsel %vm732, %v721, %v722
        %v743 = vsel %vm732, %v720, %v721
        %v744 = vsel %vm732, %v719, %v720
        %v745 = vsel %vm732, %v718, %v719
        %v746 = vsel %vm732, %v717, %v718
        %v747 = vsel %vm732, %v716, %v717
        %v748 = vsel %vm732, %v715, %v716
        %v749 = vsel %vm732, %v714, %v715
        %v750 = vsel %vm732, %v713, %v714
        %v751 = vsel %vm732, %v712, %v713
        %v752 = vsel %vm732, %v711, %v712
        %v753 = vsel %vm732, %v710, %v711
        %v754 = vsel %vm732, %v709, %v710
        %v755 = vsel %vm732, %v708, %v709
        %v756 = vsel %vm732, %v707, %v708
        %v757 = vsel %vm732, %v706, %v707
        %v758 = vsel %vm732, %v705, %v706
        %v759 = vsel %vm732, %v704, %v705
        %v760 = vsel %vm732, %v703, %v704
        %v761 = vsel %vm732, %v702, %v703
        %v762 = vsel %vm732, %v701, %v702
        %v763 = vsel %vm732, %v700, %v701
        %v764 = vsel %vm732, %v731, %v700
        %v765 = vadd.s32 %v666, 8
        %v766 = vadd.s32 %v666, 16
        %v767 = vadd.s32 %v666, 24
        %v768 = vadd.s32 %v666, 32
        %v769 = vadd.s32 %v666, 40
        %v770 = vadd.s32 %v666, 48
        %v771 = vadd.s32 %v666, 56
        %v772 = vadd.s32 %v666, 64
        %v773 = vadd.s32 %v666, 72
        %v774 = vadd.s32 %v666, 80
        %v775 = vadd.s32 %v666, 88
        %v776 = vadd.s32 %v666, 96
        %v777 = vadd.s32 %v666, 104
        %v778 = vadd.s32 %v666, 112
        %v779 = vadd.s32 %v666, 120
        %v780 = vadd.s32 %v666, 128
        %v781 = vadd.s32 %v666, 136
        %v782 = vadd.s32 %v666, 144
        %v783 = vadd.s32 %v666, 152
        %v784 = vadd.s32 %v666, 160
        %v785 = vadd.s32 %v666, 168
        %v786 = vadd.s32 %v666, 176
        %v787 = vadd.s32 %v666, 184
        %v788 = vadd.s32 %v666, 192
        %v789 = vadd.s32 %v666, 200
        %v790 = vadd.s32 %v666, 208
        %v791 = vadd.s32 %v666, 216
        %v792 = vadd.s32 %v666, 224
        %v793 = vadd.s32 %v666, 232
        %v794 = vadd.s32 %v666, 240
        %v795 = vadd.s32 %v666, 248
        %vm796 = vcmp.eq.s32.totalorder %v666, 0
        %vm797 = vcmp.eq.s32.totalorder %v765, 0
        %vm798 = vcmp.eq.s32.totalorder %v766, 0
        %vm799 = vcmp.eq.s32.totalorder %v767, 0
        %vm800 = vcmp.eq.s32.totalorder %v768, 0
        %vm801 = vcmp.eq.s32.totalorder %v769, 0
        %vm802 = vcmp.eq.s32.totalorder %v770, 0
        %vm803 = vcmp.eq.s32.totalorder %v771, 0
        %vm804 = vcmp.eq.s32.totalorder %v772, 0
        %vm805 = vcmp.eq.s32.totalorder %v773, 0
        %vm806 = vcmp.eq.s32.totalorder %v774, 0
        %vm807 = vcmp.eq.s32.totalorder %v775, 0
        %vm808 = vcmp.eq.s32.totalorder %v776, 0
        %vm809 = vcmp.eq.s32.totalorder %v777, 0
        %vm810 = vcmp.eq.s32.totalorder %v778, 0
        %vm811 = vcmp.eq.s32.totalorder %v779, 0
        %vm812 = vcmp.eq.s32.totalorder %v780, 0
        %vm813 = vcmp.eq.s32.totalorder %v781, 0
        %vm814 = vcmp.eq.s32.totalorder %v782, 0
        %vm815 = vcmp.eq.s32.totalorder %v783, 0
        %vm816 = vcmp.eq.s32.totalorder %v784, 0
        %vm817 = vcmp.eq.s32.totalorder %v785, 0
        %vm818 = vcmp.eq.s32.totalorder %v786, 0
        %vm819 = vcmp.eq.s32.totalorder %v787, 0
        %vm820 = vcmp.eq.s32.totalorder %v788, 0
        %vm821 = vcmp.eq.s32.totalorder %v789, 0
        %vm822 = vcmp.eq.s32.totalorder %v790, 0
        %vm823 = vcmp.eq.s32.totalorder %v791, 0
        %vm824 = vcmp.eq.s32.totalorder %v792, 0
        %vm825 = vcmp.eq.s32.totalorder %v793, 0
        %vm826 = vcmp.eq.s32.totalorder %v794, 0
        %vm827 = vcmp.eq.s32.totalorder %v795, 0
        %v828 = vsel %vm796, 1, 0
        %v829 = vsel %vm797, 1, 0
        %v830 = vsel %vm798, 1, 0
        %v831 = vsel %vm799, 1, 0
        %v832 = vsel %vm800, 1, 0
        %v833 = vsel %vm801, 1, 0
        %v834 = vsel %vm802, 1, 0
        %v835 = vsel %vm803, 1, 0
        %v836 = vsel %vm804, 1, 0
        %v837 = vsel %vm805, 1, 0
        %v838 = vsel %vm806, 1, 0
        %v839 = vsel %vm807, 1, 0
        %v840 = vsel %vm808, 1, 0
        %v841 = vsel %vm809, 1, 0
        %v842 = vsel %vm810, 1, 0
        %v843 = vsel %vm811, 1, 0
        %v844 = vsel %vm812, 1, 0
        %v845 = vsel %vm813, 1, 0
        %v846 = vsel %vm814, 1, 0
        %v847 = vsel %vm815, 1, 0
        %v848 = vsel %vm816, 1, 0
        %v849 = vsel %vm817, 1, 0
        %v850 = vsel %vm818, 1, 0
        %v851 = vsel %vm819, 1, 0
        %v852 = vsel %vm820, 1, 0
        %v853 = vsel %vm821, 1, 0
        %v854 = vsel %vm822, 1, 0
        %v855 = vsel %vm823, 1, 0
        %v856 = vsel %vm824, 1, 0
        %v857 = vsel %vm825, 1, 0
        %v858 = vsel %vm826, 1, 0
        %v859 = vsel %vm827, 1, 0
        %vm860 = vcmp.eq.s32.totalorder %v828, 1
        %vm861 = vcmp.eq.s32.totalorder %v829, 1
        %vm862 = vcmp.eq.s32.totalorder %v830, 1
        %vm863 = vcmp.eq.s32.totalorder %v831, 1
        %vm864 = vcmp.eq.s32.totalorder %v832, 1
        %vm865 = vcmp.eq.s32.totalorder %v833, 1
        %vm866 = vcmp.eq.s32.totalorder %v834, 1
        %vm867 = vcmp.eq.s32.totalorder %v835, 1
        %vm868 = vcmp.eq.s32.totalorder %v836, 1
        %vm869 = vcmp.eq.s32.totalorder %v837, 1
        %vm870 = vcmp.eq.s32.totalorder %v838, 1
        %vm871 = vcmp.eq.s32.totalorder %v839, 1
        %vm872 = vcmp.eq.s32.totalorder %v840, 1
        %vm873 = vcmp.eq.s32.totalorder %v841, 1
        %vm874 = vcmp.eq.s32.totalorder %v842, 1
        %vm875 = vcmp.eq.s32.totalorder %v843, 1
        %vm876 = vcmp.eq.s32.totalorder %v844, 1
        %vm877 = vcmp.eq.s32.totalorder %v845, 1
        %vm878 = vcmp.eq.s32.totalorder %v846, 1
        %vm879 = vcmp.eq.s32.totalorder %v847, 1
        %vm880 = vcmp.eq.s32.totalorder %v848, 1
        %vm881 = vcmp.eq.s32.totalorder %v849, 1
        %vm882 = vcmp.eq.s32.totalorder %v850, 1
        %vm883 = vcmp.eq.s32.totalorder %v851, 1
        %vm884 = vcmp.eq.s32.totalorder %v852, 1
        %vm885 = vcmp.eq.s32.totalorder %v853, 1
        %vm886 = vcmp.eq.s32.totalorder %v854, 1
        %vm887 = vcmp.eq.s32.totalorder %v855, 1
        %vm888 = vcmp.eq.s32.totalorder %v856, 1
        %vm889 = vcmp.eq.s32.totalorder %v857, 1
        %vm890 = vcmp.eq.s32.totalorder %v858, 1
        %vm891 = vcmp.eq.s32.totalorder %v859, 1
        %v892 = vperm.slane %v631, 0
        %v893 = vsel %vm860, %v892, %v699
        %v894 = vsel %vm861, %v892, %v698
        %v895 = vsel %vm862, %v892, %v697
        %v896 = vsel %vm863, %v892, %v696
        %v897 = vsel %vm864, %v892, %v695
        %v898 = vsel %vm865, %v892, %v694
        %v899 = vsel %vm866, %v892, %v693
        %v900 = vsel %vm867, %v892, %v692
        %v901 = vsel %vm868, %v892, %v691
        %v902 = vsel %vm869, %v892, %v690
        %v903 = vsel %vm870, %v892, %v689
        %v904 = vsel %vm871, %v892, %v688
        %v905 = vsel %vm872, %v892, %v687
        %v906 = vsel %vm873, %v892, %v686
        %v907 = vsel %vm874, %v892, %v685
        %v908 = vsel %vm875, %v892, %v684
        %v909 = vsel %vm876, %v892, %v683
        %v910 = vsel %vm877, %v892, %v682
        %v911 = vsel %vm878, %v892, %v681
        %v912 = vsel %vm879, %v892, %v680
        %v913 = vsel %vm880, %v892, %v679
        %v914 = vsel %vm881, %v892, %v678
        %v915 = vsel %vm882, %v892, %v677
        %v916 = vsel %vm883, %v892, %v676
        %v917 = vsel %vm884, %v892, %v675
        %v918 = vsel %vm885, %v892, %v674
        %v919 = vsel %vm886, %v892, %v673
        %v920 = vsel %vm887, %v892, %v672
        %v921 = vsel %vm888, %v892, %v671
        %v922 = vsel %vm889, %v892, %v670
        %v923 = vsel %vm890, %v892, %v669
        %v924 = vsel %vm891, %v892, %v668
        %vm925 = vcmp.eq.s32.totalorder %v666, 255
        %vm926 = vcmp.eq.s32.totalorder %v765, 255
        %vm927 = vcmp.eq.s32.totalorder %v766, 255
        %vm928 = vcmp.eq.s32.totalorder %v767, 255
        %vm929 = vcmp.eq.s32.totalorder %v768, 255
        %vm930 = vcmp.eq.s32.totalorder %v769, 255
        %vm931 = vcmp.eq.s32.totalorder %v770, 255
        %vm932 = vcmp.eq.s32.totalorder %v771, 255
        %vm933 = vcmp.eq.s32.totalorder %v772, 255
        %vm934 = vcmp.eq.s32.totalorder %v773, 255
        %vm935 = vcmp.eq.s32.totalorder %v774, 255
        %vm936 = vcmp.eq.s32.totalorder %v775, 255
        %vm937 = vcmp.eq.s32.totalorder %v776, 255
        %vm938 = vcmp.eq.s32.totalorder %v777, 255
        %vm939 = vcmp.eq.s32.totalorder %v778, 255
        %vm940 = vcmp.eq.s32.totalorder %v779, 255
        %vm941 = vcmp.eq.s32.totalorder %v780, 255
        %vm942 = vcmp.eq.s32.totalorder %v781, 255
        %vm943 = vcmp.eq.s32.totalorder %v782, 255
        %vm944 = vcmp.eq.s32.totalorder %v783, 255
        %vm945 = vcmp.eq.s32.totalorder %v784, 255
        %vm946 = vcmp.eq.s32.totalorder %v785, 255
        %vm947 = vcmp.eq.s32.totalorder %v786, 255
        %vm948 = vcmp.eq.s32.totalorder %v787, 255
        %vm949 = vcmp.eq.s32.totalorder %v788, 255
        %vm950 = vcmp.eq.s32.totalorder %v789, 255
        %vm951 = vcmp.eq.s32.totalorder %v790, 255
        %vm952 = vcmp.eq.s32.totalorder %v791, 255
        %vm953 = vcmp.eq.s32.totalorder %v792, 255
        %vm954 = vcmp.eq.s32.totalorder %v793, 255
        %vm955 = vcmp.eq.s32.totalorder %v794, 255
        %vm956 = vcmp.eq.s32.totalorder %v795, 255
        %v957 = vsel %vm925, 1, 0
        %v958 = vsel %vm926, 1, 0
        %v959 = vsel %vm927, 1, 0
        %v960 = vsel %vm928, 1, 0
        %v961 = vsel %vm929, 1, 0
        %v962 = vsel %vm930, 1, 0
        %v963 = vsel %vm931, 1, 0
        %v964 = vsel %vm932, 1, 0
        %v965 = vsel %vm933, 1, 0
        %v966 = vsel %vm934, 1, 0
        %v967 = vsel %vm935, 1, 0
        %v968 = vsel %vm936, 1, 0
        %v969 = vsel %vm937, 1, 0
        %v970 = vsel %vm938, 1, 0
        %v971 = vsel %vm939, 1, 0
        %v972 = vsel %vm940, 1, 0
        %v973 = vsel %vm941, 1, 0
        %v974 = vsel %vm942, 1, 0
        %v975 = vsel %vm943, 1, 0
        %v976 = vsel %vm944, 1, 0
        %v977 = vsel %vm945, 1, 0
        %v978 = vsel %vm946, 1, 0
        %v979 = vsel %vm947, 1, 0
        %v980 = vsel %vm948, 1, 0
        %v981 = vsel %vm949, 1, 0
        %v982 = vsel %vm950, 1, 0
        %v983 = vsel %vm951, 1, 0
        %v984 = vsel %vm952, 1, 0
        %v985 = vsel %vm953, 1, 0
        %v986 = vsel %vm954, 1, 0
        %v987 = vsel %vm955, 1, 0
        %v988 = vsel %vm956, 1, 0
        %vm989 = vcmp.eq.s32.totalorder %v957, 1
        %vm990 = vcmp.eq.s32.totalorder %v958, 1
        %vm991 = vcmp.eq.s32.totalorder %v959, 1
        %vm992 = vcmp.eq.s32.totalorder %v960, 1
        %vm993 = vcmp.eq.s32.totalorder %v961, 1
        %vm994 = vcmp.eq.s32.totalorder %v962, 1
        %vm995 = vcmp.eq.s32.totalorder %v963, 1
        %vm996 = vcmp.eq.s32.totalorder %v964, 1
        %vm997 = vcmp.eq.s32.totalorder %v965, 1
        %vm998 = vcmp.eq.s32.totalorder %v966, 1
        %vm999 = vcmp.eq.s32.totalorder %v967, 1
        %vm1000 = vcmp.eq.s32.totalorder %v968, 1
        %vm1001 = vcmp.eq.s32.totalorder %v969, 1
        %vm1002 = vcmp.eq.s32.totalorder %v970, 1
        %vm1003 = vcmp.eq.s32.totalorder %v971, 1
        %vm1004 = vcmp.eq.s32.totalorder %v972, 1
        %vm1005 = vcmp.eq.s32.totalorder %v973, 1
        %vm1006 = vcmp.eq.s32.totalorder %v974, 1
        %vm1007 = vcmp.eq.s32.totalorder %v975, 1
        %vm1008 = vcmp.eq.s32.totalorder %v976, 1
        %vm1009 = vcmp.eq.s32.totalorder %v977, 1
        %vm1010 = vcmp.eq.s32.totalorder %v978, 1
        %vm1011 = vcmp.eq.s32.totalorder %v979, 1
        %vm1012 = vcmp.eq.s32.totalorder %v980, 1
        %vm1013 = vcmp.eq.s32.totalorder %v981, 1
        %vm1014 = vcmp.eq.s32.totalorder %v982, 1
        %vm1015 = vcmp.eq.s32.totalorder %v983, 1
        %vm1016 = vcmp.eq.s32.totalorder %v984, 1
        %vm1017 = vcmp.eq.s32.totalorder %v985, 1
        %vm1018 = vcmp.eq.s32.totalorder %v986, 1
        %vm1019 = vcmp.eq.s32.totalorder %v987, 1
        %vm1020 = vcmp.eq.s32.totalorder %v988, 1
        %v1021 = vperm.slane %v632, 0
        %v1022 = vsel %vm989, %v1021, %v763
        %v1023 = vsel %vm990, %v1021, %v762
        %v1024 = vsel %vm991, %v1021, %v761
        %v1025 = vsel %vm992, %v1021, %v760
        %v1026 = vsel %vm993, %v1021, %v759
        %v1027 = vsel %vm994, %v1021, %v758
        %v1028 = vsel %vm995, %v1021, %v757
        %v1029 = vsel %vm996, %v1021, %v756
        %v1030 = vsel %vm997, %v1021, %v755
        %v1031 = vsel %vm998, %v1021, %v754
        %v1032 = vsel %vm999, %v1021, %v753
        %v1033 = vsel %vm1000, %v1021, %v752
        %v1034 = vsel %vm1001, %v1021, %v751
        %v1035 = vsel %vm1002, %v1021, %v750
        %v1036 = vsel %vm1003, %v1021, %v749
        %v1037 = vsel %vm1004, %v1021, %v748
        %v1038 = vsel %vm1005, %v1021, %v747
        %v1039 = vsel %vm1006, %v1021, %v746
        %v1040 = vsel %vm1007, %v1021, %v745
        %v1041 = vsel %vm1008, %v1021, %v744
        %v1042 = vsel %vm1009, %v1021, %v743
        %v1043 = vsel %vm1010, %v1021, %v742
        %v1044 = vsel %vm1011, %v1021, %v741
        %v1045 = vsel %vm1012, %v1021, %v740
        %v1046 = vsel %vm1013, %v1021, %v739
        %v1047 = vsel %vm1014, %v1021, %v738
        %v1048 = vsel %vm1015, %v1021, %v737
        %v1049 = vsel %vm1016, %v1021, %v736
        %v1050 = vsel %vm1017, %v1021, %v735
        %v1051 = vsel %vm1018, %v1021, %v734
        %v1052 = vsel %vm1019, %v1021, %v733
        %v1053 = vsel %vm1020, %v1021, %v764
        %v1054 = vadd.f32 %v893, %v1022
        %v1055 = vadd.f32 %v894, %v1023
        %v1056 = vadd.f32 %v895, %v1024
        %v1057 = vadd.f32 %v896, %v1025
        %v1058 = vadd.f32 %v897, %v1026
        %v1059 = vadd.f32 %v898, %v1027
        %v1060 = vadd.f32 %v899, %v1028
        %v1061 = vadd.f32 %v900, %v1029
        %v1062 = vadd.f32 %v901, %v1030
        %v1063 = vadd.f32 %v902, %v1031
        %v1064 = vadd.f32 %v903, %v1032
        %v1065 = vadd.f32 %v904, %v1033
        %v1066 = vadd.f32 %v905, %v1034
        %v1067 = vadd.f32 %v906, %v1035
        %v1068 = vadd.f32 %v907, %v1036
        %v1069 = vadd.f32 %v908, %v1037
        %v1070 = vadd.f32 %v909, %v1038
        %v1071 = vadd.f32 %v910, %v1039
        %v1072 = vadd.f32 %v911, %v1040
        %v1073 = vadd.f32 %v912, %v1041
        %v1074 = vadd.f32 %v913, %v1042
        %v1075 = vadd.f32 %v914, %v1043
        %v1076 = vadd.f32 %v915, %v1044
        %v1077 = vadd.f32 %v916, %v1045
        %v1078 = vadd.f32 %v917, %v1046
        %v1079 = vadd.f32 %v918, %v1047
        %v1080 = vadd.f32 %v919, %v1048
        %v1081 = vadd.f32 %v920, %v1049
        %v1082 = vadd.f32 %v921, %v1050
        %v1083 = vadd.f32 %v922, %v1051
        %v1084 = vadd.f32 %v923, %v1052
        %v1085 = vadd.f32 %v924, %v1053
        %v1086 = vpack.c.bf16 %v1055, %v1054
        %v1087 = vpack.c.bf16 %v1057, %v1056
        %v1088 = vpack.c.bf16 %v1059, %v1058
        %v1089 = vpack.c.bf16 %v1061, %v1060
        %v1090 = vpack.c.bf16 %v1063, %v1062
        %v1091 = vpack.c.bf16 %v1065, %v1064
        %v1092 = vpack.c.bf16 %v1067, %v1066
        %v1093 = vpack.c.bf16 %v1069, %v1068
        %v1094 = vpack.c.bf16 %v1071, %v1070
        %v1095 = vpack.c.bf16 %v1073, %v1072
        %v1096 = vpack.c.bf16 %v1075, %v1074
        %v1097 = vpack.c.bf16 %v1077, %v1076
        %v1098 = vpack.c.bf16 %v1079, %v1078
        %v1099 = vpack.c.bf16 %v1081, %v1080
        %v1100 = vpack.c.bf16 %v1083, %v1082
        %v1101 = vpack.c.bf16 %v1085, %v1084
        %v1102 = vld [vmem:[#allocation8] sm:$0xf]
        %v1103 = vld [vmem:[#allocation8 + $0x4] sm:$0xf]
        %v1104 = vld [vmem:[#allocation8 + $0x8] sm:$0xf]
        %v1105 = vld [vmem:[#allocation8 + $0xc] sm:$0xf]
        %v1106 = vld [vmem:[#allocation8 + $0x10] sm:$0xf]
        %v1107 = vld [vmem:[#allocation8 + $0x14] sm:$0xf]
        %v1108 = vld [vmem:[#allocation8 + $0x18] sm:$0xf]
        %v1109 = vld [vmem:[#allocation8 + $0x1c] sm:$0xf]
        %v1110 = vld [vmem:[#allocation8 + $0x20] sm:$0xf]
        %v1111 = vld [vmem:[#allocation8 + $0x24] sm:$0xf]
        %v1112 = vld [vmem:[#allocation8 + $0x28] sm:$0xf]
        %v1113 = vld [vmem:[#allocation8 + $0x2c] sm:$0xf]
        %v1114 = vld [vmem:[#allocation8 + $0x30] sm:$0xf]
        %v1115 = vld [vmem:[#allocation8 + $0x34] sm:$0xf]
        %v1116 = vld [vmem:[#allocation8 + $0x38] sm:$0xf]
        %v1117 = vld [vmem:[#allocation8 + $0x3c] sm:$0xf]
        %v1118 = vld [vmem:[%s5] sm:$0x1]
        %v1120 = vperm.slane %v1118, 0
        %v1138 = vunpack.c.l.b16 %v1102
        %v1139 = vunpack.c.l.b16 %v1103
        %v1140 = vunpack.c.l.b16 %v1104
        %v1141 = vunpack.c.l.b16 %v1105
        %v1142 = vunpack.c.l.b16 %v1106
        %v1143 = vunpack.c.l.b16 %v1107
        %v1144 = vunpack.c.l.b16 %v1108
        %v1145 = vunpack.c.l.b16 %v1109
        %v1146 = vunpack.c.l.b16 %v1110
        %v1147 = vunpack.c.l.b16 %v1111
        %v1148 = vunpack.c.l.b16 %v1112
        %v1149 = vunpack.c.l.b16 %v1113
        %v1150 = vunpack.c.l.b16 %v1114
        %v1151 = vunpack.c.l.b16 %v1115
        %v1152 = vunpack.c.l.b16 %v1116
        %v1153 = vunpack.c.l.b16 %v1117
        %v1154 = vpack.c.b16 %v1139, %v1138
        %v1155 = vpack.c.b16 %v1141, %v1140
        %v1156 = vpack.c.b16 %v1143, %v1142
        %v1157 = vpack.c.b16 %v1145, %v1144
        %v1158 = vpack.c.b16 %v1147, %v1146
        %v1159 = vpack.c.b16 %v1149, %v1148
        %v1160 = vpack.c.b16 %v1151, %v1150
        %v1161 = vpack.c.b16 %v1153, %v1152
        %1170 = vmatpush.bf16.msra.mxu0 %v1161
        %1171 = vmatpush.bf16.msra.mxu0 %v1160
        %1172 = vmatpush.bf16.msra.mxu0 %v1159
        %1173 = vmatpush.bf16.msra.mxu0 %v1158
        %1174 = vmatpush.bf16.msra.mxu0 %v1157
        %1175 = vmatpush.bf16.msra.mxu0 %v1156
        %1176 = vmatpush.bf16.msra.mxu0 %v1155
        %1177 = vmatpush.bf16.msra.mxu0 %v1154
        %1178 = vmatmul.bf16.gmra.mxu0 %v1086
        %v1179 = vpop.f32.mrf.mxu0
        %v1180 = vadd.f32 %v1120, %v1179
        %v1181 = vpop.f32.mrf.mxu0
        %v1182 = vadd.f32 %v1120, %v1181
        %1183 = vmatmul.bf16.gmra.mxu0 %v1087
        %v1184 = vpop.f32.mrf.mxu0
        %v1185 = vadd.f32 %v1120, %v1184
        %v1186 = vpop.f32.mrf.mxu0
        %v1187 = vadd.f32 %v1120, %v1186
        %1188 = vmatmul.bf16.gmra.mxu0 %v1088
        %v1189 = vpop.f32.mrf.mxu0
        %v1190 = vadd.f32 %v1120, %v1189
        %v1191 = vpop.f32.mrf.mxu0
        %v1192 = vadd.f32 %v1120, %v1191
        %1193 = vmatmul.bf16.gmra.mxu0 %v1089
        %v1194 = vpop.f32.mrf.mxu0
        %v1195 = vadd.f32 %v1120, %v1194
        %v1196 = vpop.f32.mrf.mxu0
        %v1197 = vadd.f32 %v1120, %v1196
        %1198 = vmatmul.bf16.gmra.mxu0 %v1090
        %v1199 = vpop.f32.mrf.mxu0
        %v1200 = vadd.f32 %v1120, %v1199
        %v1201 = vpop.f32.mrf.mxu0
        %v1202 = vadd.f32 %v1120, %v1201
        %1203 = vmatmul.bf16.gmra.mxu0 %v1091
        %v1204 = vpop.f32.mrf.mxu0
        %v1205 = vadd.f32 %v1120, %v1204
        %v1206 = vpop.f32.mrf.mxu0
        %v1207 = vadd.f32 %v1120, %v1206
        %1208 = vmatmul.bf16.gmra.mxu0 %v1092
        %v1209 = vpop.f32.mrf.mxu0
        %v1210 = vadd.f32 %v1120, %v1209
        %v1211 = vpop.f32.mrf.mxu0
        %v1212 = vadd.f32 %v1120, %v1211
        %1213 = vmatmul.bf16.gmra.mxu0 %v1093
        %v1214 = vpop.f32.mrf.mxu0
        %v1215 = vadd.f32 %v1120, %v1214
        %v1216 = vpop.f32.mrf.mxu0
        %v1217 = vadd.f32 %v1120, %v1216
        %1218 = vmatmul.bf16.gmra.mxu0 %v1094
        %v1219 = vpop.f32.mrf.mxu0
        %v1220 = vadd.f32 %v1120, %v1219
        %v1221 = vpop.f32.mrf.mxu0
        %v1222 = vadd.f32 %v1120, %v1221
        %1223 = vmatmul.bf16.gmra.mxu0 %v1095
        %v1224 = vpop.f32.mrf.mxu0
        %v1225 = vadd.f32 %v1120, %v1224
        %v1226 = vpop.f32.mrf.mxu0
        %v1227 = vadd.f32 %v1120, %v1226
        %1228 = vmatmul.bf16.gmra.mxu0 %v1096
        %v1229 = vpop.f32.mrf.mxu0
        %v1230 = vadd.f32 %v1120, %v1229
        %v1231 = vpop.f32.mrf.mxu0
        %v1232 = vadd.f32 %v1120, %v1231
        %1233 = vmatmul.bf16.gmra.mxu0 %v1097
        %v1234 = vpop.f32.mrf.mxu0
        %v1235 = vadd.f32 %v1120, %v1234
        %v1236 = vpop.f32.mrf.mxu0
        %v1237 = vadd.f32 %v1120, %v1236
        %1238 = vmatmul.bf16.gmra.mxu0 %v1098
        %v1239 = vpop.f32.mrf.mxu0
        %v1240 = vadd.f32 %v1120, %v1239
        %v1241 = vpop.f32.mrf.mxu0
        %v1242 = vadd.f32 %v1120, %v1241
        %1243 = vmatmul.bf16.gmra.mxu0 %v1099
        %v1244 = vpop.f32.mrf.mxu0
        %v1245 = vadd.f32 %v1120, %v1244
        %v1246 = vpop.f32.mrf.mxu0
        %v1247 = vadd.f32 %v1120, %v1246
        %1248 = vmatmul.bf16.gmra.mxu0 %v1100
        %v1249 = vpop.f32.mrf.mxu0
        %v1250 = vadd.f32 %v1120, %v1249
        %v1251 = vpop.f32.mrf.mxu0
        %v1252 = vadd.f32 %v1120, %v1251
        %1253 = vmatmul.bf16.gmra.mxu0 %v1101
        %v1254 = vpop.f32.mrf.mxu0
        %v1255 = vadd.f32 %v1120, %v1254
        %v1256 = vpop.f32.mrf.mxu0
        %v1257 = vadd.f32 %v1120, %v1256
        %1258 = vdwg.mxu0
        %1259 = vst [vmem:[%s343] sm:$0xff] %v1180
        %1260 = vst [vmem:[%s343 + $0x8] sm:$0xff] %v1182
        %1261 = vst [vmem:[%s343 + $0x10] sm:$0xff] %v1185
        %1262 = vst [vmem:[%s343 + $0x18] sm:$0xff] %v1187
        %1263 = vst [vmem:[%s343 + $0x20] sm:$0xff] %v1190
        %1264 = vst [vmem:[%s343 + $0x28] sm:$0xff] %v1192
        %1265 = vst [vmem:[%s343 + $0x30] sm:$0xff] %v1195
        %1266 = vst [vmem:[%s343 + $0x38] sm:$0xff] %v1197
        %1267 = vst [vmem:[%s343 + $0x40] sm:$0xff] %v1200
        %1268 = vst [vmem:[%s343 + $0x48] sm:$0xff] %v1202
        %1269 = vst [vmem:[%s343 + $0x50] sm:$0xff] %v1205
        %1270 = vst [vmem:[%s343 + $0x58] sm:$0xff] %v1207
        %1271 = vst [vmem:[%s343 + $0x60] sm:$0xff] %v1210
        %1272 = vst [vmem:[%s343 + $0x68] sm:$0xff] %v1212
        %1273 = vst [vmem:[%s343 + $0x70] sm:$0xff] %v1215
        %1274 = vst [vmem:[%s343 + $0x78] sm:$0xff] %v1217
        %1275 = vst [vmem:[%s343 + $0x80] sm:$0xff] %v1220
        %1276 = vst [vmem:[%s343 + $0x88] sm:$0xff] %v1222
        %1277 = vst [vmem:[%s343 + $0x90] sm:$0xff] %v1225
        %1278 = vst [vmem:[%s343 + $0x98] sm:$0xff] %v1227
        %1279 = vst [vmem:[%s343 + $0xa0] sm:$0xff] %v1230
        %1280 = vst [vmem:[%s343 + $0xa8] sm:$0xff] %v1232
        %1281 = vst [vmem:[%s343 + $0xb0] sm:$0xff] %v1235
        %1282 = vst [vmem:[%s343 + $0xb8] sm:$0xff] %v1237
        %1283 = vst [vmem:[%s343 + $0xc0] sm:$0xff] %v1240
        %1284 = vst [vmem:[%s343 + $0xc8] sm:$0xff] %v1242
        %1285 = vst [vmem:[%s343 + $0xd0] sm:$0xff] %v1245
        %1286 = vst [vmem:[%s343 + $0xd8] sm:$0xff] %v1247
        %1287 = vst [vmem:[%s343 + $0xe0] sm:$0xff] %v1250
        %1288 = vst [vmem:[%s343 + $0xe8] sm:$0xff] %v1252
        %1289 = vst [vmem:[%s343 + $0xf0] sm:$0xff] %v1255
        %1290 = vst [vmem:[%s343 + $0xf8] sm:$0xff] %v1257
        %s1291 = sand.u32 %s171, 1
        %s1292 = scalar_lea.sflag [#allocation4], %s1291
        %s1293 = sand.u32 %s171, 1
        %s1294 = smul.addr %s1293, 256
        %s1295 = scalar_lea.vmem [#allocation10], %s1294
        // Predicated region
        $region61: #{tpu_custom_call.1} parent=43 // pred_check
          %p1296 = pneg %p181
        $region62: #{tpu_custom_call.1} parent=43 // pred_check_branch
          %1298 = sbr.rel (%p1296) target = $region64
        $region63: #{tpu_custom_call.1} parent=43 // pred_region
          %s1299 = smul.u32 32, %s27
          %1301 = vsyncadd %s1292, 0
          %s1302 = smul.addr %s1299, 8
          %s1303 = scalar_lea.hbm %s6, %s1302
          %s1304 = sshll.u32 %s1295, 4
          %s1305 = int_to_ptr.vmem [resolvable:$true] %s1304
          %s1306 = sshll.u32 %s1303, 4
          %s1307 = int_to_ptr.hbm [resolvable:$true] %s1306
          %1312 = dma.vmem_to_hbm [thread:$0]  %s1305, 4096, %s1307, %s1292, 128, 128, 8
        $region64: #{tpu_custom_call.1} parent=43 // pred_fallthru
          _
      $region44: #{tpu_custom_call.1} parent=5 // pred_fallthru
        _
      %p1313 = scmp.le.s32.totalorder 2, %s22
      // Predicated region
      $region65: #{tpu_custom_call.1} parent=5 // pred_check
        %p1314 = pneg %p1313
      $region66: #{tpu_custom_call.1} parent=5 // pred_check_branch
        %1316 = sbr.rel (%p1314) target = $region68
      $region67: #{tpu_custom_call.1} parent=5 // pred_region
        %s1317 = ssub.s32 %s22, 2
        // Predicated region
        $region69: #{tpu_custom_call.1} parent=67 // pred_check
          %p1318 = pneg %p187
        $region70: #{tpu_custom_call.1} parent=67 // pred_check_branch
          %1320 = sbr.rel (%p1318) target = $region72
        $region71: #{tpu_custom_call.1} parent=67 // pred_region
          %s1321 = sand.u32 %s172, 1
          %s1322 = scalar_lea.sflag [#allocation4], %s1321
          %s1323 = sand.u32 %s172, 1
          %s1324 = smul.addr %s1323, 256
          %s1325 = scalar_lea.vmem [#allocation10], %s1324
          %1327 = dma.done %s1322, 4096
        $region72: #{tpu_custom_call.1} parent=67 // pred_fallthru
          _
      $region68: #{tpu_custom_call.1} parent=5 // pred_fallthru
        _
    $region6: #{tpu_custom_call.1} parent=1 // loop_footer
      %s26 = sadd.s32 1, %s22
    $region7: #{tpu_custom_call.1} parent=1 // loop_footer_branch
      %21 = sbr.rel target = $region3
    $region8: #{tpu_custom_call.1} parent=1 // loop_exit
      _
    %1328 = vsyncpa [#allocation3], 1
    %s1329 = scalar_lea.sflag [#allocation3], 1
    %1330 = vsyncpa %s1329, 1
    %1331 = vsyncpa [#allocation6], 1
    %s1332 = scalar_lea.sflag [#allocation6], 1
    %1333 = vsyncpa %s1332, 1
    %1334 = vsyncpa [#allocation9], 1
    %1335 = vsyncpa [#allocation4], 1
    %s1336 = scalar_lea.sflag [#allocation4], 1
    %1337 = vsyncpa %s1336, 1

</llo_original>
